<compile_context>
chip_gen: v7x
topology: tpu7x:2x2x1
jax: 0.10.0
libtpu: 0.0.40
codegen_flags: <defaults>
</compile_context>

<pallas_src>
import jax
import jax.numpy as jnp
from jax import lax
from jax.experimental import pallas as pl
from jax.experimental.pallas import tpu as pltpu

HIDDEN = 256


def _round_up(x, m):
    return ((x + m - 1) // m) * m


def value_net_kernel(so_ref, w1_ref, b1_ref, w2_ref, b2_ref, w3_ref, b3_ref,
                     out_ref):
    # ---- layer 1: single fused matmul over the concatenated input + ReLU ----
    h1 = jnp.dot(so_ref[...], w1_ref[...], preferred_element_type=jnp.float32)
    h1 = jnp.maximum(h1 + b1_ref[...], 0.0)

    # ---- layer 2: dominant 256x256 MXU matmul (bf16/fp8 operands, f32 acc) --
    h2 = jnp.dot(h1.astype(w2_ref.dtype), w2_ref[...],
                 preferred_element_type=jnp.float32)
    h2 = jnp.maximum(h2 + b2_ref[...], 0.0)

    # ---- layer 3: NT matmul  w3[1,256] . h2[TB,256]^T -> lane-dense [1,TB] --
    q = lax.dot_general(w3_ref[...], h2.astype(w3_ref.dtype),
                        dimension_numbers=(((1,), (1,)), ((), ())),
                        preferred_element_type=jnp.float32)
    out_ref[...] = (q + b3_ref[0, 0]).astype(out_ref.dtype)


def value_net_h(state, option, params, *, compute_dtype=jnp.bfloat16,
                layer2_dtype=None, block_b=1024):
    """state: [B, state_dim], option: [B, option_dim] -> [B, 1] float32.

    layer2_dtype: optional override (e.g. jnp.float8_e4m3fn on v7x) for the
    operands of the dominant 256x256 layer-2 matmul.
    """
    w1, b1, w2, b2, w3, b3 = params
    B, state_dim = state.shape
    option_dim = option.shape[1]
    in_dim = state_dim + option_dim

    # ---- one-time weight layout plumbing (wrapper side) ---------------------
    w1_c = w1.astype(compute_dtype)                                  # [in_dim, 256]
    w2_c = w2.astype(layer2_dtype if layer2_dtype is not None
                     else compute_dtype)                             # [256, 256]
    b1_f = b1.reshape(1, HIDDEN).astype(jnp.float32)
    b2_f = b2.reshape(1, HIDDEN).astype(jnp.float32)
    w3_row = w3.reshape(1, HIDDEN).astype(compute_dtype)             # [1, 256]
    b3_s = b3.reshape(1, 1).astype(jnp.float32)                      # scalar -> SMEM

    # ---- batch tile selection ------------------------------------------------
    # Output blocks are lane-dense (1, TB); when the grid has >1 step TB must be
    # a multiple of 128 (lane width).  Small batches run as a single block whose
    # shape equals the full (padded) array dims.
    block_b = max(128, (block_b // 128) * 128)
    B16 = _round_up(B, 16)                    # bf16 packs 16 rows per sublane group
    if B16 <= 128:
        TB = B16                              # single block
    else:
        # aim for >=2 grid steps so the "parallel" axis shards across the two
        # TensorCores on v7x; cap with block_b to bound per-step VMEM.
        TB = min(block_b, _round_up(-(-B // 2), 128))
    n_blocks = pl.cdiv(B, TB)
    B_pad = n_blocks * TB

    # ---- concat once in the wrapper; pad batch; cast matmul operands --------
    so = jnp.concatenate([state, option], axis=1)
    if B_pad != B:
        so = jnp.pad(so, ((0, B_pad - B), (0, 0)))
    so_c = so.astype(compute_dtype)

    const = lambda i: (0, 0)      # resident weights / biases
    batch = lambda i: (i, 0)      # tiled over batch (sublane axis of the input)
    out_map = lambda i: (0, i)    # lane-dense output row

    def make_call(weight_mode):
        if weight_mode is None:
            wspec = lambda shape: pl.BlockSpec(shape, const)
        else:
            wspec = lambda shape: pl.BlockSpec(shape, const,
                                               pipeline_mode=weight_mode)
        return pl.pallas_call(
            value_net_kernel,
            out_shape=jax.ShapeDtypeStruct((1, B_pad), jnp.float32),
            grid=(n_blocks,),
            in_specs=[
                pl.BlockSpec((TB, in_dim), batch),                   # so
                wspec((in_dim, HIDDEN)),                             # w1
                wspec((1, HIDDEN)),                                  # b1
                wspec((HIDDEN, HIDDEN)),                             # w2
                wspec((1, HIDDEN)),                                  # b2
                wspec((1, HIDDEN)),                                  # w3 row
                pl.BlockSpec(memory_space=pltpu.MemorySpace.SMEM),   # b3 scalar
            ],
            out_specs=pl.BlockSpec((1, TB), out_map),
            compiler_params=pltpu.CompilerParams(
                dimension_semantics=("parallel",)),
        )

    args = (so_c, w1_c, b1_f, w2_c, b2_f, w3_row, b3_s)
    try:
        # Constant-index weights only need a single buffer (frees ~150-300 KB
        # of VMEM headroom, which matters as TB grows on v7x's 64 MiB VMEM).
        out = make_call(pl.Buffered(1))(*args)
    except Exception:
        # This jax version rejects pipeline_mode / single buffering here;
        # fall back to default (double) buffering — correctness unchanged.
        out = make_call(None)(*args)

    # Padded batch rows (garbage derived from relu(b1)) are sliced off here.
    return out[0, :B].reshape(B, 1)


def init_params(key, state_dim, option_dim):
    """Deterministic init mimicking nn.Linear default (U[-1/sqrt(fan_in), ...])."""
    in_dim = state_dim + option_dim
    ks = jax.random.split(key, 6)

    def lin(kw, kb, fan_in, fan_out):
        bound = 1.0 / jnp.sqrt(jnp.float32(fan_in))
        w = jax.random.uniform(kw, (fan_in, fan_out), jnp.float32, -bound, bound)
        b = jax.random.uniform(kb, (1, fan_out), jnp.float32, -bound, bound)
        return w, b

    w1, b1 = lin(ks[0], ks[1], in_dim, HIDDEN)
    w2, b2 = lin(ks[2], ks[3], HIDDEN, HIDDEN)
    w3, b3 = lin(ks[4], ks[5], HIDDEN, 1)
    return (w1, b1, w2, b2, w3, b3)


def reference(state, option, params):
    w1, b1, w2, b2, w3, b3 = params
    so = jnp.concatenate([state, option], axis=1)
    h1 = jnp.maximum(so @ w1 + b1, 0.0)
    h2 = jnp.maximum(h1 @ w2 + b2, 0.0)
    return h2 @ w3 + b3


if __name__ == "__main__":
    batch, state_dim, option_dim = 2, 16, 8

    key = jax.random.PRNGKey(0)
    k_state, k_option, k_params = jax.random.split(key, 3)

    state = jax.random.normal(k_state, (batch, state_dim), jnp.float32)
    option = jax.random.normal(k_option, (batch, option_dim), jnp.float32)
    params = init_params(k_params, state_dim, option_dim)

    ref = reference(state, option, params)

    # f32 compute path: tight-ish validation (tolerance loosened slightly vs
    # 1e-5 since MXU accumulation order differs from the XLA reference).
    out_f32 = value_net_h(state, option, params, compute_dtype=jnp.float32)
    out_f32 = jax.block_until_ready(out_f32)
    assert out_f32.shape == (batch, 1)
    assert jnp.allclose(out_f32, ref, atol=1e-4, rtol=1e-4), "f32 mismatch vs reference"

    # bf16-operand path (default, fast MXU path): looser tolerance.
    out_bf16 = value_net_h(state, option, params, compute_dtype=jnp.bfloat16)
    out_bf16 = jax.block_until_ready(out_bf16)
    assert out_bf16.shape == (batch, 1)
    assert jnp.allclose(out_bf16, ref, atol=5e-2, rtol=5e-2), "bf16 mismatch vs reference"

    # TODO(synk): on v7x, pass layer2_dtype=jnp.float8_e4m3fn to run the
    # dominant 256x256 matmul on the fp8 MXU path (not exercised here since the
    # test chip may be v5e/v6e).

    print("KERNEL_OK")
</pallas_src>

<mosaic_0001>
module attributes {stable_mosaic.version = 11 : i64} {
  func.func @value_net_kernel(%arg0: i32, %arg1: memref<16x24xf32, #tpu.memory_space<vmem>>, %arg2: memref<24x256xf32, #tpu.memory_space<vmem>>, %arg3: memref<1x256xf32, #tpu.memory_space<vmem>>, %arg4: memref<256x256xf32, #tpu.memory_space<vmem>>, %arg5: memref<1x256xf32, #tpu.memory_space<vmem>>, %arg6: memref<1x256xf32, #tpu.memory_space<vmem>>, %arg7: memref<1x1xf32, #tpu.memory_space<smem>>, %arg8: memref<1x16xf32, #tpu.memory_space<vmem>>) attributes {dimension_semantics = [#tpu.dimension_semantics<parallel>], iteration_bounds = array<i64: 1>, scalar_prefetch = 0 : i64, scratch_operands = 0 : i64, tpu.core_type = #tpu.core_type<tc>, window_params = [{transform_indices = @transform_0, window_bounds = array<i64: 16, 24>}, {pipeline_mode = #tpu.pipeline_mode<synchronous>, transform_indices = @transform_1, window_bounds = array<i64: 24, 256>}, {pipeline_mode = #tpu.pipeline_mode<synchronous>, transform_indices = @transform_2, window_bounds = array<i64: 1, 256>}, {pipeline_mode = #tpu.pipeline_mode<synchronous>, transform_indices = @transform_3, window_bounds = array<i64: 256, 256>}, {pipeline_mode = #tpu.pipeline_mode<synchronous>, transform_indices = @transform_4, window_bounds = array<i64: 1, 256>}, {pipeline_mode = #tpu.pipeline_mode<synchronous>, transform_indices = @transform_5, window_bounds = array<i64: 1, 256>}, {transform_indices = @transform_6, window_bounds = array<i64: 1, 1>}, {transform_indices = @transform_7, window_bounds = array<i64: 1, 16>}]} {
    %c0 = arith.constant 0 : index
    %c0_0 = arith.constant 0 : index
    %0 = vector.load %arg1[%c0, %c0_0] : memref<16x24xf32, #tpu.memory_space<vmem>>, vector<16x24xf32>
    %c0_1 = arith.constant 0 : index
    %c0_2 = arith.constant 0 : index
    %1 = vector.load %arg2[%c0_1, %c0_2] : memref<24x256xf32, #tpu.memory_space<vmem>>, vector<24x256xf32>
    %cst = arith.constant dense<0.000000e+00> : vector<16x256xf32>
    %2 = tpu.matmul %0, %1, %cst {dimension_numbers = #tpu.dot_dimension_numbers<[1], [0], [0], [1], [0, 0, 1, 1], [], []>} : vector<16x24xf32>, vector<24x256xf32>, vector<16x256xf32> -> vector<16x256xf32>
    %c0_3 = arith.constant 0 : index
    %c0_4 = arith.constant 0 : index
    %3 = vector.load %arg3[%c0_3, %c0_4] : memref<1x256xf32, #tpu.memory_space<vmem>>, vector<1x256xf32>
    %4 = vector.broadcast %3 : vector<1x256xf32> to vector<16x256xf32>
    %5 = arith.addf %2, %4 : vector<16x256xf32>
    %cst_5 = arith.constant 0.000000e+00 : f32
    %6 = vector.broadcast %cst_5 : f32 to vector<16x256xf32>
    %7 = arith.maximumf %5, %6 : vector<16x256xf32>
    %c0_6 = arith.constant 0 : index
    %c0_7 = arith.constant 0 : index
    %8 = vector.load %arg4[%c0_6, %c0_7] : memref<256x256xf32, #tpu.memory_space<vmem>>, vector<256x256xf32>
    %cst_8 = arith.constant dense<0.000000e+00> : vector<16x256xf32>
    %9 = tpu.matmul %7, %8, %cst_8 {dimension_numbers = #tpu.dot_dimension_numbers<[1], [0], [0], [1], [0, 0, 1, 1], [], []>} : vector<16x256xf32>, vector<256x256xf32>, vector<16x256xf32> -> vector<16x256xf32>
    %c0_9 = arith.constant 0 : index
    %c0_10 = arith.constant 0 : index
    %10 = vector.load %arg5[%c0_9, %c0_10] : memref<1x256xf32, #tpu.memory_space<vmem>>, vector<1x256xf32>
    %11 = vector.broadcast %10 : vector<1x256xf32> to vector<16x256xf32>
    %12 = arith.addf %9, %11 : vector<16x256xf32>
    %cst_11 = arith.constant 0.000000e+00 : f32
    %13 = vector.broadcast %cst_11 : f32 to vector<16x256xf32>
    %14 = arith.maximumf %12, %13 : vector<16x256xf32>
    %c0_12 = arith.constant 0 : index
    %c0_13 = arith.constant 0 : index
    %15 = vector.load %arg6[%c0_12, %c0_13] : memref<1x256xf32, #tpu.memory_space<vmem>>, vector<1x256xf32>
    %cst_14 = arith.constant dense<0.000000e+00> : vector<1x16xf32>
    %16 = tpu.matmul %15, %14, %cst_14 {dimension_numbers = #tpu.dot_dimension_numbers<[1], [1], [0], [0], [0, 0, 1, 0], [], []>} : vector<1x256xf32>, vector<16x256xf32>, vector<1x16xf32> -> vector<1x16xf32>
    %c0_15 = arith.constant 0 : index
    %c0_16 = arith.constant 0 : index
    %17 = memref.load %arg7[%c0_15, %c0_16] : memref<1x1xf32, #tpu.memory_space<smem>>
    %18 = vector.broadcast %17 : f32 to vector<1x16xf32>
    %19 = arith.addf %16, %18 : vector<1x16xf32>
    %c0_17 = arith.constant 0 : index
    %c0_18 = arith.constant 0 : index
    %20 = vector.load %arg8[%c0_17, %c0_18] : memref<1x16xf32, #tpu.memory_space<vmem>>, vector<1x16xf32>
    tpu.vector_store %arg8[%c0_17, %c0_18], %19 {strides = array<i32>} : memref<1x16xf32, #tpu.memory_space<vmem>>, vector<1x16xf32>,
    return
  }
  func.func @transform_0(%arg0: i32) -> (i32, i32) {
    %c0_i32 = arith.constant 0 : i32
    %c0_i32_0 = arith.constant 0 : i32
    return %arg0, %c0_i32 : i32, i32
  }
  func.func @transform_1(%arg0: i32) -> (i32, i32) {
    %c0_i32 = arith.constant 0 : i32
    %c0_i32_0 = arith.constant 0 : i32
    %c0_i32_1 = arith.constant 0 : i32
    return %c0_i32, %c0_i32_0 : i32, i32
  }
  func.func @transform_2(%arg0: i32) -> (i32, i32) {
    %c0_i32 = arith.constant 0 : i32
    %c0_i32_0 = arith.constant 0 : i32
    %c0_i32_1 = arith.constant 0 : i32
    return %c0_i32, %c0_i32_0 : i32, i32
  }
  func.func @transform_3(%arg0: i32) -> (i32, i32) {
    %c0_i32 = arith.constant 0 : i32
    %c0_i32_0 = arith.constant 0 : i32
    %c0_i32_1 = arith.constant 0 : i32
    return %c0_i32, %c0_i32_0 : i32, i32
  }
  func.func @transform_4(%arg0: i32) -> (i32, i32) {
    %c0_i32 = arith.constant 0 : i32
    %c0_i32_0 = arith.constant 0 : i32
    %c0_i32_1 = arith.constant 0 : i32
    return %c0_i32, %c0_i32_0 : i32, i32
  }
  func.func @transform_5(%arg0: i32) -> (i32, i32) {
    %c0_i32 = arith.constant 0 : i32
    %c0_i32_0 = arith.constant 0 : i32
    %c0_i32_1 = arith.constant 0 : i32
    return %c0_i32, %c0_i32_0 : i32, i32
  }
  func.func @transform_6(%arg0: i32) -> (i32, i32) {
    %c0_i32 = arith.constant 0 : i32
    %c0_i32_0 = arith.constant 0 : i32
    %c0_i32_1 = arith.constant 0 : i32
    return %c0_i32, %c0_i32_0 : i32, i32
  }
  func.func @transform_7(%arg0: i32) -> (i32, i32) {
    %c0_i32 = arith.constant 0 : i32
    %c0_i32_0 = arith.constant 0 : i32
    return %c0_i32, %arg0 : i32, i32
  }
}

module attributes {stable_mosaic.version = 11 : i64} {
  func.func @value_net_kernel(%arg0: i32, %arg1: memref<16x24xf32, #tpu.memory_space<vmem>>, %arg2: memref<24x256xf32, #tpu.memory_space<vmem>>, %arg3: memref<1x256xf32, #tpu.memory_space<vmem>>, %arg4: memref<256x256xf32, #tpu.memory_space<vmem>>, %arg5: memref<1x256xf32, #tpu.memory_space<vmem>>, %arg6: memref<1x256xf32, #tpu.memory_space<vmem>>, %arg7: memref<1x1xf32, #tpu.memory_space<smem>>, %arg8: memref<1x16xf32, #tpu.memory_space<vmem>>) attributes {dimension_semantics = [#tpu.dimension_semantics<parallel>], iteration_bounds = array<i64: 1>, scalar_prefetch = 0 : i64, scratch_operands = 0 : i64, tpu.core_type = #tpu.core_type<tc>, window_params = [{transform_indices = @transform_0, window_bounds = array<i64: 16, 24>}, {pipeline_mode = #tpu.pipeline_mode<synchronous>, transform_indices = @transform_1, window_bounds = array<i64: 24, 256>}, {pipeline_mode = #tpu.pipeline_mode<synchronous>, transform_indices = @transform_2, window_bounds = array<i64: 1, 256>}, {pipeline_mode = #tpu.pipeline_mode<synchronous>, transform_indices = @transform_3, window_bounds = array<i64: 256, 256>}, {pipeline_mode = #tpu.pipeline_mode<synchronous>, transform_indices = @transform_4, window_bounds = array<i64: 1, 256>}, {pipeline_mode = #tpu.pipeline_mode<synchronous>, transform_indices = @transform_5, window_bounds = array<i64: 1, 256>}, {transform_indices = @transform_6, window_bounds = array<i64: 1, 1>}, {transform_indices = @transform_7, window_bounds = array<i64: 1, 16>}]} {
    %c0 = arith.constant 0 : index
    %c0_0 = arith.constant 0 : index
    %0 = vector.load %arg1[%c0, %c0_0] : memref<16x24xf32, #tpu.memory_space<vmem>>, vector<16x24xf32>
    %c0_1 = arith.constant 0 : index
    %c0_2 = arith.constant 0 : index
    %1 = vector.load %arg2[%c0_1, %c0_2] : memref<24x256xf32, #tpu.memory_space<vmem>>, vector<24x256xf32>
    %cst = arith.constant dense<0.000000e+00> : vector<16x256xf32>
    %2 = tpu.matmul %0, %1, %cst {dimension_numbers = #tpu.dot_dimension_numbers<[1], [0], [0], [1], [0, 0, 1, 1], [], []>} : vector<16x24xf32>, vector<24x256xf32>, vector<16x256xf32> -> vector<16x256xf32>
    %c0_3 = arith.constant 0 : index
    %c0_4 = arith.constant 0 : index
    %3 = vector.load %arg3[%c0_3, %c0_4] : memref<1x256xf32, #tpu.memory_space<vmem>>, vector<1x256xf32>
    %4 = vector.broadcast %3 : vector<1x256xf32> to vector<16x256xf32>
    %5 = arith.addf %2, %4 : vector<16x256xf32>
    %cst_5 = arith.constant 0.000000e+00 : f32
    %6 = vector.broadcast %cst_5 : f32 to vector<16x256xf32>
    %7 = arith.maximumf %5, %6 : vector<16x256xf32>
    %c0_6 = arith.constant 0 : index
    %c0_7 = arith.constant 0 : index
    %8 = vector.load %arg4[%c0_6, %c0_7] : memref<256x256xf32, #tpu.memory_space<vmem>>, vector<256x256xf32>
    %cst_8 = arith.constant dense<0.000000e+00> : vector<16x256xf32>
    %9 = tpu.matmul %7, %8, %cst_8 {dimension_numbers = #tpu.dot_dimension_numbers<[1], [0], [0], [1], [0, 0, 1, 1], [], []>} : vector<16x256xf32>, vector<256x256xf32>, vector<16x256xf32> -> vector<16x256xf32>
    %c0_9 = arith.constant 0 : index
    %c0_10 = arith.constant 0 : index
    %10 = vector.load %arg5[%c0_9, %c0_10] : memref<1x256xf32, #tpu.memory_space<vmem>>, vector<1x256xf32>
    %11 = vector.broadcast %10 : vector<1x256xf32> to vector<16x256xf32>
    %12 = arith.addf %9, %11 : vector<16x256xf32>
    %cst_11 = arith.constant 0.000000e+00 : f32
    %13 = vector.broadcast %cst_11 : f32 to vector<16x256xf32>
    %14 = arith.maximumf %12, %13 : vector<16x256xf32>
    %c0_12 = arith.constant 0 : index
    %c0_13 = arith.constant 0 : index
    %15 = vector.load %arg6[%c0_12, %c0_13] : memref<1x256xf32, #tpu.memory_space<vmem>>, vector<1x256xf32>
    %cst_14 = arith.constant dense<0.000000e+00> : vector<1x16xf32>
    %16 = tpu.matmul %15, %14, %cst_14 {dimension_numbers = #tpu.dot_dimension_numbers<[1], [1], [0], [0], [0, 0, 1, 0], [], []>} : vector<1x256xf32>, vector<16x256xf32>, vector<1x16xf32> -> vector<1x16xf32>
    %c0_15 = arith.constant 0 : index
    %c0_16 = arith.constant 0 : index
    %17 = memref.load %arg7[%c0_15, %c0_16] : memref<1x1xf32, #tpu.memory_space<smem>>
    %18 = vector.broadcast %17 : f32 to vector<1x16xf32>
    %19 = arith.addf %16, %18 : vector<1x16xf32>
    %c0_17 = arith.constant 0 : index
    %c0_18 = arith.constant 0 : index
    %20 = vector.load %arg8[%c0_17, %c0_18] : memref<1x16xf32, #tpu.memory_space<vmem>>, vector<1x16xf32>
    tpu.vector_store %arg8[%c0_17, %c0_18], %19 {strides = array<i32>} : memref<1x16xf32, #tpu.memory_space<vmem>>, vector<1x16xf32>,
    return
  }
  func.func @transform_0(%arg0: i32) -> (i32, i32) {
    %c0_i32 = arith.constant 0 : i32
    %c0_i32_0 = arith.constant 0 : i32
    return %arg0, %c0_i32 : i32, i32
  }
  func.func @transform_1(%arg0: i32) -> (i32, i32) {
    %c0_i32 = arith.constant 0 : i32
    %c0_i32_0 = arith.constant 0 : i32
    %c0_i32_1 = arith.constant 0 : i32
    return %c0_i32, %c0_i32_0 : i32, i32
  }
  func.func @transform_2(%arg0: i32) -> (i32, i32) {
    %c0_i32 = arith.constant 0 : i32
    %c0_i32_0 = arith.constant 0 : i32
    %c0_i32_1 = arith.constant 0 : i32
    return %c0_i32, %c0_i32_0 : i32, i32
  }
  func.func @transform_3(%arg0: i32) -> (i32, i32) {
    %c0_i32 = arith.constant 0 : i32
    %c0_i32_0 = arith.constant 0 : i32
    %c0_i32_1 = arith.constant 0 : i32
    return %c0_i32, %c0_i32_0 : i32, i32
  }
  func.func @transform_4(%arg0: i32) -> (i32, i32) {
    %c0_i32 = arith.constant 0 : i32
    %c0_i32_0 = arith.constant 0 : i32
    %c0_i32_1 = arith.constant 0 : i32
    return %c0_i32, %c0_i32_0 : i32, i32
  }
  func.func @transform_5(%arg0: i32) -> (i32, i32) {
    %c0_i32 = arith.constant 0 : i32
    %c0_i32_0 = arith.constant 0 : i32
    %c0_i32_1 = arith.constant 0 : i32
    return %c0_i32, %c0_i32_0 : i32, i32
  }
  func.func @transform_6(%arg0: i32) -> (i32, i32) {
    %c0_i32 = arith.constant 0 : i32
    %c0_i32_0 = arith.constant 0 : i32
    %c0_i32_1 = arith.constant 0 : i32
    return %c0_i32, %c0_i32_0 : i32, i32
  }
  func.func @transform_7(%arg0: i32) -> (i32, i32) {
    %c0_i32 = arith.constant 0 : i32
    %c0_i32_0 = arith.constant 0 : i32
    return %c0_i32, %arg0 : i32, i32
  }
}

</mosaic_0001>

<llo_original>
// kernel: tpu_custom_call.1
$region0: #{tpu_custom_call.1}
  #allocation0 [shape = 'u32[]', space=smem, size = 0x4, offset = 0x4, fixed_abs, tag = 'smem constant byte address 0x4 - core index']
  #allocation1 [shape = 'u32[144,128]{1,0:T(1,128)}', space=vmem, size = 0x12000, scoped, tag = 'internal scratch']
  #allocation2 [shape = 'f32[1,1]{1,0:T(1,128)S(6)}', space=smem, size = 0x200, scoped, tag = 'scoped memory for tpu_custom_call.1']
  %s0 = inlined_call_operand.hbm [shape: f32[16,24], index: 0, kind: input, shape index: {}]
  %s1 = inlined_call_operand.hbm [shape: f32[24,256], index: 1, kind: input, shape index: {}]
  %s2 = inlined_call_operand.vmem [shape: f32[1,256], index: 2, kind: input, shape index: {}]
  %s3 = inlined_call_operand.hbm [shape: f32[256,256], index: 3, kind: input, shape index: {}]
  %s4 = inlined_call_operand.vmem [shape: f32[1,256], index: 4, kind: input, shape index: {}]
  %s5 = inlined_call_operand.vmem [shape: f32[1,256], index: 5, kind: input, shape index: {}]
  %s6 = inlined_call_operand.<no memory space> [shape: f32[1,1], index: 6, kind: input, shape index: {}]
  %s7 = inlined_call_operand.hbm [shape: f32[1,16], index: 7, kind: output, shape index: {}]
  %s8 = sld [smem:[#allocation0]]
  $region50: #{tpu_custom_call.1} parent=0
    _
  %s10 = ssub.s32 1, %s8
  %s11 = scalar_select 0, %s10, %s8
  %12 = sst [smem:[#allocation2]] %s6
  $region1: #{tpu_custom_call.1} parent=0
    #allocation3 [shape = 'u8[8192]{0}', space=vmem, size = 0x2000, scoped, tag = 'input window, operand 0, single buffered']
    #allocation4 [shape = 's32[1]{0}', space=sflag, size = 0x4, scoped, tag = 'scoped memory for tpu_custom_call.1']
    #allocation5 [shape = 's32[1]{0}', space=sflag, size = 0x4, scoped, tag = 'scoped memory for tpu_custom_call.1']
    #allocation6 [shape = 'u8[24576]{0}', space=vmem, size = 0x6000, scoped, tag = 'input window, operand 1, single buffered']
    #allocation7 [shape = 's32[1]{0}', space=sflag, size = 0x4, scoped, tag = 'scoped memory for tpu_custom_call.1']
    #allocation8 [shape = 'u8[262144]{0}', space=vmem, size = 0x40000, scoped, tag = 'input window, operand 3, single buffered']
    #allocation9 [shape = 'u8[512]{0}', space=vmem, size = 0x400, scoped, tag = 'output window, operand 0, single buffered']
    %13 = vsyncpa [#allocation4], 0
    %14 = vsyncpa [#allocation7], 0
    %15 = vsyncpa [#allocation5], 0
    // Predicated region
    $region2: #{tpu_custom_call.1} parent=1 // pred_check
      _
    $region3: #{tpu_custom_call.1} parent=1 // pred_check_branch
      %17 = sbr.rel (0) target = $region5
    $region4: #{tpu_custom_call.1} parent=1 // pred_region
      %s19 = ssub.s32 256, 256
      %20 = vsyncadd [#allocation4], %s19
      %s21 = sshll.u32 [#allocation3], 4
      %s22 = int_to_ptr.vmem [resolvable:$true] %s21
      %27 = dma.hbm_to_vmem [thread:$0]  %s0, 256, %s22, [#allocation4], 128, 128, 8
    $region5: #{tpu_custom_call.1} parent=1 // pred_fallthru
      _
    // Predicated region
    $region6: #{tpu_custom_call.1} parent=1 // pred_check
      _
    $region7: #{tpu_custom_call.1} parent=1 // pred_check_branch
      %29 = sbr.rel (0) target = $region9
    $region8: #{tpu_custom_call.1} parent=1 // pred_region
      %s31 = ssub.s32 768, 768
      %32 = vsyncadd [#allocation7], %s31
      %s33 = sshll.u32 [#allocation6], 4
      %s34 = int_to_ptr.vmem [resolvable:$true] %s33
      %39 = dma.hbm_to_vmem [thread:$0]  %s1, 768, %s34, [#allocation7], 256, 256, 16
    $region9: #{tpu_custom_call.1} parent=1 // pred_fallthru
      _
    // Predicated region
    $region10: #{tpu_custom_call.1} parent=1 // pred_check
      _
    $region11: #{tpu_custom_call.1} parent=1 // pred_check_branch
      %41 = sbr.rel (0) target = $region13
    $region12: #{tpu_custom_call.1} parent=1 // pred_region
      _
    $region13: #{tpu_custom_call.1} parent=1 // pred_fallthru
      _
    // Predicated region
    $region14: #{tpu_custom_call.1} parent=1 // pred_check
      _
    $region15: #{tpu_custom_call.1} parent=1 // pred_check_branch
      %43 = sbr.rel (0) target = $region17
    $region16: #{tpu_custom_call.1} parent=1 // pred_region
      %s45 = ssub.s32 8192, 8192
      %46 = vsyncadd [#allocation7], %s45
      %s47 = sshll.u32 [#allocation8], 4
      %s48 = int_to_ptr.vmem [resolvable:$true] %s47
      %53 = dma.hbm_to_vmem [thread:$0]  %s3, 8192, %s48, [#allocation7], 256, 256, 16
    $region17: #{tpu_custom_call.1} parent=1 // pred_fallthru
      _
    // Predicated region
    $region18: #{tpu_custom_call.1} parent=1 // pred_check
      _
    $region19: #{tpu_custom_call.1} parent=1 // pred_check_branch
      %55 = sbr.rel (0) target = $region21
    $region20: #{tpu_custom_call.1} parent=1 // pred_region
      _
    $region21: #{tpu_custom_call.1} parent=1 // pred_fallthru
      _
    // Predicated region
    $region22: #{tpu_custom_call.1} parent=1 // pred_check
      _
    $region23: #{tpu_custom_call.1} parent=1 // pred_check_branch
      %57 = sbr.rel (0) target = $region25
    $region24: #{tpu_custom_call.1} parent=1 // pred_region
      _
    $region25: #{tpu_custom_call.1} parent=1 // pred_fallthru
      _
    // Predicated region
    $region26: #{tpu_custom_call.1} parent=1 // pred_check
      _
    $region27: #{tpu_custom_call.1} parent=1 // pred_check_branch
      %59 = sbr.rel (0) target = $region29
    $region28: #{tpu_custom_call.1} parent=1 // pred_region
      _
    $region29: #{tpu_custom_call.1} parent=1 // pred_fallthru
      _
    // Predicated region
    $region30: #{tpu_custom_call.1} parent=1 // pred_check
      _
    $region31: #{tpu_custom_call.1} parent=1 // pred_check_branch
      %61 = sbr.rel (0) target = $region33
    $region32: #{tpu_custom_call.1} parent=1 // pred_region
      %62 = dma.done [#allocation4], 256
    $region33: #{tpu_custom_call.1} parent=1 // pred_fallthru
      _
    // Predicated region
    $region34: #{tpu_custom_call.1} parent=1 // pred_check
      _
    $region35: #{tpu_custom_call.1} parent=1 // pred_check_branch
      %64 = sbr.rel (0) target = $region37
    $region36: #{tpu_custom_call.1} parent=1 // pred_region
      %65 = dma.done [#allocation7], 768
    $region37: #{tpu_custom_call.1} parent=1 // pred_fallthru
      _
    // Predicated region
    $region38: #{tpu_custom_call.1} parent=1 // pred_check
      _
    $region39: #{tpu_custom_call.1} parent=1 // pred_check_branch
      %67 = sbr.rel (0) target = $region41
    $region40: #{tpu_custom_call.1} parent=1 // pred_region
      %68 = dma.done [#allocation7], 8192
    $region41: #{tpu_custom_call.1} parent=1 // pred_fallthru
      _
    %v69 = vld [vmem:[#allocation3] sm:$0xff]
    %v70 = vld [vmem:[#allocation3 + $0x8] sm:$0xff]
    %v71 = vld [vmem:[#allocation6] sm:$0xff]
    %v72 = vld [vmem:[#allocation6 + $0x8] sm:$0xff]
    %v73 = vld [vmem:[#allocation6 + $0x10] sm:$0xff]
    %v74 = vld [vmem:[#allocation6 + $0x18] sm:$0xff]
    %v75 = vld [vmem:[#allocation6 + $0x20] sm:$0xff]
    %v76 = vld [vmem:[#allocation6 + $0x28] sm:$0xff]
    %v77 = vld [vmem:[%s2] sm:$0x3]
    %v79 = vlaneseq
    %v80 = vshrl.u32 %v79, 7
    %v81 = vsub.s32 0, %v80
    %v82 = vrot.slane %v77, %v81
    %v83 = vlaneseq
    %v84 = vshrl.u32 %v83, 7
    %v85 = vsub.s32 1, %v84
    %v86 = vrot.slane %v77, %v85
    %vm89 = vcmask 195584
    %v91 = vsel %vm89, %v69, 0
    %v94 = vsel %vm89, %v70, 0
    %96 = vmatprep.subr.mxu0 %v72
    %97 = vmatpush1.msra.mxu0 %v71
    %98 = vmatprep.subr.mxu0 %v74
    %99 = vmatpush1.msra.mxu0 %v73
    %100 = vmatprep.subr.mxu0 %v76
    %101 = vmatpush1.msra.mxu0 %v75
    %102 = vmatprep.subr.mxu0 0.0
    %103 = vmatpush1.msra.mxu0 0.0
    %104 = vmatprep.subr.mxu0 0.0
    %105 = vmatpush1.msra.mxu0 0.0
    %106 = vmatprep.subr.mxu0 0.0
    %107 = vmatpush1.msra.mxu0 0.0
    %108 = vmatprep.subr.mxu0 0.0
    %109 = vmatpush1.msra.mxu0 0.0
    %110 = vmatprep.subr.mxu0 0.0
    %111 = vmatpush1.msra.mxu0 0.0
    %112 = vmatprep.subr.mxu0 0.0
    %113 = vmatpush1.msra.mxu0 0.0
    %114 = vmatprep.subr.mxu0 0.0
    %115 = vmatpush1.msra.mxu0 0.0
    %116 = vmatprep.subr.mxu0 0.0
    %117 = vmatpush1.msra.mxu0 0.0
    %118 = vmatprep.subr.mxu0 0.0
    %119 = vmatpush1.msra.mxu0 0.0
    %120 = vmatprep.subr.mxu0 0.0
    %121 = vmatpush1.msra.mxu0 0.0
    %122 = vmatprep.subr.mxu0 0.0
    %123 = vmatpush1.msra.mxu0 0.0
    %124 = vmatprep.subr.mxu0 0.0
    %125 = vmatpush1.msra.mxu0 0.0
    %126 = vmatprep.subr.mxu0 0.0
    %127 = vmatpush1.msra.mxu0 0.0
    %128 = vmatprep.subr.mxu0 0.0
    %129 = vmatpush1.msra.mxu0 0.0
    %130 = vmatprep.subr.mxu0 0.0
    %131 = vmatpush1.msra.mxu0 0.0
    %132 = vmatprep.subr.mxu0 0.0
    %133 = vmatpush1.msra.mxu0 0.0
    %134 = vmatprep.subr.mxu0 0.0
    %135 = vmatpush1.msra.mxu0 0.0
    %136 = vmatprep.subr.mxu0 0.0
    %137 = vmatpush1.msra.mxu0 0.0
    %138 = vmatprep.subr.mxu0 0.0
    %139 = vmatpush1.msra.mxu0 0.0
    %140 = vmatprep.subr.mxu0 0.0
    %141 = vmatpush1.msra.mxu0 0.0
    %142 = vmatprep.subr.mxu0 0.0
    %143 = vmatpush1.msra.mxu0 0.0
    %144 = vmatprep.subr.mxu0 0.0
    %145 = vmatpush1.msra.mxu0 0.0
    %146 = vmatprep.subr.mxu0 0.0
    %147 = vmatpush1.msra.mxu0 0.0
    %148 = vmatprep.subr.mxu0 0.0
    %149 = vmatpush1.msra.mxu0 0.0
    %150 = vmatprep.subr.mxu0 0.0
    %151 = vmatpush1.msra.mxu0 0.0
    %152 = vmatprep.subr.mxu0 0.0
    %153 = vmatpush1.msra.mxu0 0.0
    %154 = vmatprep.subr.mxu0 0.0
    %155 = vmatpush1.msra.mxu0 0.0
    %156 = vmatprep.subr.mxu0 0.0
    %157 = vmatpush1.msra.mxu0 0.0
    %158 = vmatprep.subr.mxu0 0.0
    %159 = vmatpush1.msra.mxu0 0.0
    %160 = vmatprep.mubr.f32.mxu0 0.0
    %161 = vmatmul.mubr.f32.gmra.mrb[0].mxu0 %v91
    %v162 = vpop.f32.mrb[0].mxu0
    %v163 = vadd.f32 %v82, %v162
    %v164 = vpop.f32.mrb[0].mxu0
    %v165 = vadd.f32 %v86, %v164
    %166 = vmatprep.mubr.f32.mxu0 0.0
    %167 = vmatmul.mubr.f32.gmra.mrb[0].mxu0 %v94
    %v168 = vpop.f32.mrb[0].mxu0
    %v169 = vadd.f32 %v82, %v168
    %v170 = vpop.f32.mrb[0].mxu0
    %v171 = vadd.f32 %v86, %v170
    %172 = vdwg.mxu0
    %v173 = vmax.f32 %v163, 0.0
    %v174 = vmax.f32 %v165, 0.0
    %v175 = vmax.f32 %v169, 0.0
    %v176 = vmax.f32 %v171, 0.0
    %v177 = vld [vmem:[#allocation8] sm:$0xff]
    %v178 = vld [vmem:[#allocation8 + $0x8] sm:$0xff]
    %v179 = vld [vmem:[#allocation8 + $0x10] sm:$0xff]
    %v180 = vld [vmem:[#allocation8 + $0x18] sm:$0xff]
    %v181 = vld [vmem:[#allocation8 + $0x20] sm:$0xff]
    %v182 = vld [vmem:[#allocation8 + $0x28] sm:$0xff]
    %v183 = vld [vmem:[#allocation8 + $0x30] sm:$0xff]
    %v184 = vld [vmem:[#allocation8 + $0x38] sm:$0xff]
    %v185 = vld [vmem:[#allocation8 + $0x40] sm:$0xff]
    %v186 = vld [vmem:[#allocation8 + $0x48] sm:$0xff]
    %v187 = vld [vmem:[#allocation8 + $0x50] sm:$0xff]
    %v188 = vld [vmem:[#allocation8 + $0x58] sm:$0xff]
    %v189 = vld [vmem:[#allocation8 + $0x60] sm:$0xff]
    %v190 = vld [vmem:[#allocation8 + $0x68] sm:$0xff]
    %v191 = vld [vmem:[#allocation8 + $0x70] sm:$0xff]
    %v192 = vld [vmem:[#allocation8 + $0x78] sm:$0xff]
    %v193 = vld [vmem:[#allocation8 + $0x80] sm:$0xff]
    %v194 = vld [vmem:[#allocation8 + $0x88] sm:$0xff]
    %v195 = vld [vmem:[#allocation8 + $0x90] sm:$0xff]
    %v196 = vld [vmem:[#allocation8 + $0x98] sm:$0xff]
    %v197 = vld [vmem:[#allocation8 + $0xa0] sm:$0xff]
    %v198 = vld [vmem:[#allocation8 + $0xa8] sm:$0xff]
    %v199 = vld [vmem:[#allocation8 + $0xb0] sm:$0xff]
    %v200 = vld [vmem:[#allocation8 + $0xb8] sm:$0xff]
    %v201 = vld [vmem:[#allocation8 + $0xc0] sm:$0xff]
    %v202 = vld [vmem:[#allocation8 + $0xc8] sm:$0xff]
    %v203 = vld [vmem:[#allocation8 + $0xd0] sm:$0xff]
    %v204 = vld [vmem:[#allocation8 + $0xd8] sm:$0xff]
    %v205 = vld [vmem:[#allocation8 + $0xe0] sm:$0xff]
    %v206 = vld [vmem:[#allocation8 + $0xe8] sm:$0xff]
    %v207 = vld [vmem:[#allocation8 + $0xf0] sm:$0xff]
    %v208 = vld [vmem:[#allocation8 + $0xf8] sm:$0xff]
    %v209 = vld [vmem:[#allocation8 + $0x100] sm:$0xff]
    %v210 = vld [vmem:[#allocation8 + $0x108] sm:$0xff]
    %v211 = vld [vmem:[#allocation8 + $0x110] sm:$0xff]
    %v212 = vld [vmem:[#allocation8 + $0x118] sm:$0xff]
    %v213 = vld [vmem:[#allocation8 + $0x120] sm:$0xff]
    %v214 = vld [vmem:[#allocation8 + $0x128] sm:$0xff]
    %v215 = vld [vmem:[#allocation8 + $0x130] sm:$0xff]
    %v216 = vld [vmem:[#allocation8 + $0x138] sm:$0xff]
    %v217 = vld [vmem:[#allocation8 + $0x140] sm:$0xff]
    %v218 = vld [vmem:[#allocation8 + $0x148] sm:$0xff]
    %v219 = vld [vmem:[#allocation8 + $0x150] sm:$0xff]
    %v220 = vld [vmem:[#allocation8 + $0x158] sm:$0xff]
    %v221 = vld [vmem:[#allocation8 + $0x160] sm:$0xff]
    %v222 = vld [vmem:[#allocation8 + $0x168] sm:$0xff]
    %v223 = vld [vmem:[#allocation8 + $0x170] sm:$0xff]
    %v224 = vld [vmem:[#allocation8 + $0x178] sm:$0xff]
    %v225 = vld [vmem:[#allocation8 + $0x180] sm:$0xff]
    %v226 = vld [vmem:[#allocation8 + $0x188] sm:$0xff]
    %v227 = vld [vmem:[#allocation8 + $0x190] sm:$0xff]
    %v228 = vld [vmem:[#allocation8 + $0x198] sm:$0xff]
    %v229 = vld [vmem:[#allocation8 + $0x1a0] sm:$0xff]
    %v230 = vld [vmem:[#allocation8 + $0x1a8] sm:$0xff]
    %v231 = vld [vmem:[#allocation8 + $0x1b0] sm:$0xff]
    %v232 = vld [vmem:[#allocation8 + $0x1b8] sm:$0xff]
    %v233 = vld [vmem:[#allocation8 + $0x1c0] sm:$0xff]
    %v234 = vld [vmem:[#allocation8 + $0x1c8] sm:$0xff]
    %v235 = vld [vmem:[#allocation8 + $0x1d0] sm:$0xff]
    %v236 = vld [vmem:[#allocation8 + $0x1d8] sm:$0xff]
    %v237 = vld [vmem:[#allocation8 + $0x1e0] sm:$0xff]
    %v238 = vld [vmem:[#allocation8 + $0x1e8] sm:$0xff]
    %v239 = vld [vmem:[#allocation8 + $0x1f0] sm:$0xff]
    %v240 = vld [vmem:[#allocation8 + $0x1f8] sm:$0xff]
    %v241 = vld [vmem:[%s4] sm:$0x3]
    %v243 = vlaneseq
    %v244 = vshrl.u32 %v243, 7
    %v245 = vsub.s32 0, %v244
    %v246 = vrot.slane %v241, %v245
    %v247 = vlaneseq
    %v248 = vshrl.u32 %v247, 7
    %v249 = vsub.s32 1, %v248
    %v250 = vrot.slane %v241, %v249
    %253 = vmatprep.subr.mxu0 %v178
    %254 = vmatpush1.msra.mxu0 %v177
    %255 = vmatprep.subr.mxu0 %v180
    %256 = vmatpush1.msra.mxu0 %v179
    %257 = vmatprep.subr.mxu0 %v182
    %258 = vmatpush1.msra.mxu0 %v181
    %259 = vmatprep.subr.mxu0 %v184
    %260 = vmatpush1.msra.mxu0 %v183
    %261 = vmatprep.subr.mxu0 %v186
    %262 = vmatpush1.msra.mxu0 %v185
    %263 = vmatprep.subr.mxu0 %v188
    %264 = vmatpush1.msra.mxu0 %v187
    %265 = vmatprep.subr.mxu0 %v190
    %266 = vmatpush1.msra.mxu0 %v189
    %267 = vmatprep.subr.mxu0 %v192
    %268 = vmatpush1.msra.mxu0 %v191
    %269 = vmatprep.subr.mxu0 %v194
    %270 = vmatpush1.msra.mxu0 %v193
    %271 = vmatprep.subr.mxu0 %v196
    %272 = vmatpush1.msra.mxu0 %v195
    %273 = vmatprep.subr.mxu0 %v198
    %274 = vmatpush1.msra.mxu0 %v197
    %275 = vmatprep.subr.mxu0 %v200
    %276 = vmatpush1.msra.mxu0 %v199
    %277 = vmatprep.subr.mxu0 %v202
    %278 = vmatpush1.msra.mxu0 %v201
    %279 = vmatprep.subr.mxu0 %v204
    %280 = vmatpush1.msra.mxu0 %v203
    %281 = vmatprep.subr.mxu0 %v206
    %282 = vmatpush1.msra.mxu0 %v205
    %283 = vmatprep.subr.mxu0 %v208
    %284 = vmatpush1.msra.mxu0 %v207
    %285 = vmatprep.subr.mxu0 %v210
    %286 = vmatpush1.msra.mxu0 %v209
    %287 = vmatprep.subr.mxu0 %v212
    %288 = vmatpush1.msra.mxu0 %v211
    %289 = vmatprep.subr.mxu0 %v214
    %290 = vmatpush1.msra.mxu0 %v213
    %291 = vmatprep.subr.mxu0 %v216
    %292 = vmatpush1.msra.mxu0 %v215
    %293 = vmatprep.subr.mxu0 %v218
    %294 = vmatpush1.msra.mxu0 %v217
    %295 = vmatprep.subr.mxu0 %v220
    %296 = vmatpush1.msra.mxu0 %v219
    %297 = vmatprep.subr.mxu0 %v222
    %298 = vmatpush1.msra.mxu0 %v221
    %299 = vmatprep.subr.mxu0 %v224
    %300 = vmatpush1.msra.mxu0 %v223
    %301 = vmatprep.subr.mxu0 %v226
    %302 = vmatpush1.msra.mxu0 %v225
    %303 = vmatprep.subr.mxu0 %v228
    %304 = vmatpush1.msra.mxu0 %v227
    %305 = vmatprep.subr.mxu0 %v230
    %306 = vmatpush1.msra.mxu0 %v229
    %307 = vmatprep.subr.mxu0 %v232
    %308 = vmatpush1.msra.mxu0 %v231
    %309 = vmatprep.subr.mxu0 %v234
    %310 = vmatpush1.msra.mxu0 %v233
    %311 = vmatprep.subr.mxu0 %v236
    %312 = vmatpush1.msra.mxu0 %v235
    %313 = vmatprep.subr.mxu0 %v238
    %314 = vmatpush1.msra.mxu0 %v237
    %315 = vmatprep.subr.mxu0 %v240
    %316 = vmatpush1.msra.mxu0 %v239
    %317 = vmatprep.mubr.f32.mxu0 %v174
    %318 = vmatmul.mubr.f32.gmra.mrb[0].mxu0 %v173
    %v319 = vpop.f32.mrb[0].mxu0
    %v320 = vadd.f32 %v246, %v319
    %v321 = vpop.f32.mrb[0].mxu0
    %v322 = vadd.f32 %v250, %v321
    %323 = vmatprep.mubr.f32.mxu0 %v176
    %324 = vmatmul.mubr.f32.gmra.mrb[0].mxu0 %v175
    %v325 = vpop.f32.mrb[0].mxu0
    %v326 = vadd.f32 %v246, %v325
    %v327 = vpop.f32.mrb[0].mxu0
    %v328 = vadd.f32 %v250, %v327
    %329 = vdwg.mxu0
    %v330 = vmax.f32 %v320, 0.0
    %v331 = vmax.f32 %v322, 0.0
    %v332 = vmax.f32 %v326, 0.0
    %v333 = vmax.f32 %v328, 0.0
    %v334 = vld [vmem:[%s5] sm:$0x3]
    %s335 = sld [smem:[#allocation2]]
    %v336 = vstv %s335
    %v338 = vlaneseq
    %v339 = vshrl.u32 %v338, 7
    %v340 = vsub.s32 0, %v339
    %v341 = vrot.slane %v334, %v340
    %v342 = vlaneseq
    %v343 = vshrl.u32 %v342, 7
    %v344 = vsub.s32 1, %v343
    %v345 = vrot.slane %v334, %v344
    %348 = vmatprep.subr.mxu0 %v331
    %349 = vmatpush1.xpose.msra.mxu0 %v330
    %350 = vmatprep.subr.mxu0 %v333
    %351 = vmatpush1.xpose.msra.mxu0 %v332
    %352 = vmatprep.subr.mxu0 0.0
    %353 = vmatpush1.xpose.msra.mxu0 0.0
    %354 = vmatprep.subr.mxu0 0.0
    %355 = vmatpush1.xpose.msra.mxu0 0.0
    %356 = vmatprep.subr.mxu0 0.0
    %357 = vmatpush1.xpose.msra.mxu0 0.0
    %358 = vmatprep.subr.mxu0 0.0
    %359 = vmatpush1.xpose.msra.mxu0 0.0
    %360 = vmatprep.subr.mxu0 0.0
    %361 = vmatpush1.xpose.msra.mxu0 0.0
    %362 = vmatprep.subr.mxu0 0.0
    %363 = vmatpush1.xpose.msra.mxu0 0.0
    %364 = vmatprep.subr.mxu0 0.0
    %365 = vmatpush1.xpose.msra.mxu0 0.0
    %366 = vmatprep.subr.mxu0 0.0
    %367 = vmatpush1.xpose.msra.mxu0 0.0
    %368 = vmatprep.subr.mxu0 0.0
    %369 = vmatpush1.xpose.msra.mxu0 0.0
    %370 = vmatprep.subr.mxu0 0.0
    %371 = vmatpush1.xpose.msra.mxu0 0.0
    %372 = vmatprep.subr.mxu0 0.0
    %373 = vmatpush1.xpose.msra.mxu0 0.0
    %374 = vmatprep.subr.mxu0 0.0
    %375 = vmatpush1.xpose.msra.mxu0 0.0
    %376 = vmatprep.subr.mxu0 0.0
    %377 = vmatpush1.xpose.msra.mxu0 0.0
    %378 = vmatprep.subr.mxu0 0.0
    %379 = vmatpush1.xpose.msra.mxu0 0.0
    %380 = vmatprep.subr.mxu0 0.0
    %381 = vmatpush1.xpose.msra.mxu0 0.0
    %382 = vmatprep.subr.mxu0 0.0
    %383 = vmatpush1.xpose.msra.mxu0 0.0
    %384 = vmatprep.subr.mxu0 0.0
    %385 = vmatpush1.xpose.msra.mxu0 0.0
    %386 = vmatprep.subr.mxu0 0.0
    %387 = vmatpush1.xpose.msra.mxu0 0.0
    %388 = vmatprep.subr.mxu0 0.0
    %389 = vmatpush1.xpose.msra.mxu0 0.0
    %390 = vmatprep.subr.mxu0 0.0
    %391 = vmatpush1.xpose.msra.mxu0 0.0
    %392 = vmatprep.subr.mxu0 0.0
    %393 = vmatpush1.xpose.msra.mxu0 0.0
    %394 = vmatprep.subr.mxu0 0.0
    %395 = vmatpush1.xpose.msra.mxu0 0.0
    %396 = vmatprep.subr.mxu0 0.0
    %397 = vmatpush1.xpose.msra.mxu0 0.0
    %398 = vmatprep.subr.mxu0 0.0
    %399 = vmatpush1.xpose.msra.mxu0 0.0
    %400 = vmatprep.subr.mxu0 0.0
    %401 = vmatpush1.xpose.msra.mxu0 0.0
    %402 = vmatprep.subr.mxu0 0.0
    %403 = vmatpush1.xpose.msra.mxu0 0.0
    %404 = vmatprep.subr.mxu0 0.0
    %405 = vmatpush1.xpose.msra.mxu0 0.0
    %406 = vmatprep.subr.mxu0 0.0
    %407 = vmatpush1.xpose.msra.mxu0 0.0
    %408 = vmatprep.subr.mxu0 0.0
    %409 = vmatpush1.xpose.msra.mxu0 0.0
    %410 = vmatprep.subr.mxu0 0.0
    %411 = vmatpush1.xpose.msra.mxu0 0.0
    %412 = vmatprep.mubr.f32.mxu0 %v345
    %413 = vmatmul.mubr.f32.gmra.mrb[0].mxu0 %v341
    %v414 = vpop.f32.mrb[0].mxu0
    %v415 = vadd.f32 %v336, %v414
    %v416 = vpop.f32.mrb[0].mxu0
    %417 = vdwg.mxu0
    %vm418 = vcmask 122880
    %419 = vst.msk [vmem:[#allocation9] sm:$0x1] %vm418, %v415
    // Predicated region
    $region42: #{tpu_custom_call.1} parent=1 // pred_check
      _
    $region43: #{tpu_custom_call.1} parent=1 // pred_check_branch
      %421 = sbr.rel (0) target = $region45
    $region44: #{tpu_custom_call.1} parent=1 // pred_region
      %s423 = ssub.s32 16, 16
      %424 = vsyncadd [#allocation5], %s423
      %s426 = sshll.u32 [#allocation9], 4
      %s427 = int_to_ptr.vmem [resolvable:$true] %s426
      %429 = dma.vmem_to_hbm [thread:$0]  %s427, 16, %s7, [#allocation5]
    $region45: #{tpu_custom_call.1} parent=1 // pred_fallthru
      _
    // Predicated region
    $region46: #{tpu_custom_call.1} parent=1 // pred_check
      _
    $region47: #{tpu_custom_call.1} parent=1 // pred_check_branch
      %431 = sbr.rel (0) target = $region49
    $region48: #{tpu_custom_call.1} parent=1 // pred_region
      %432 = dma.done [#allocation5], 16
    $region49: #{tpu_custom_call.1} parent=1 // pred_fallthru
      _
    %433 = vsyncpa [#allocation4], 1
    %434 = vsyncpa [#allocation7], 1
    %435 = vsyncpa [#allocation5], 1

// kernel: tpu_custom_call.1
$region0: #{tpu_custom_call.1}
  #allocation0 [shape = 'u32[]', space=smem, size = 0x4, offset = 0x4, fixed_abs, tag = 'smem constant byte address 0x4 - core index']
  #allocation1 [shape = 'u32[144,128]{1,0:T(1,128)}', space=vmem, size = 0x12000, scoped, tag = 'internal scratch']
  #allocation2 [shape = 'f32[1,1]{1,0:T(1,128)S(6)}', space=smem, size = 0x200, scoped, tag = 'scoped memory for tpu_custom_call.1']
  %s0 = inlined_call_operand.hbm [shape: f32[16,24], index: 0, kind: input, shape index: {}]
  %s1 = inlined_call_operand.hbm [shape: f32[24,256], index: 1, kind: input, shape index: {}]
  %s2 = inlined_call_operand.vmem [shape: f32[1,256], index: 2, kind: input, shape index: {}]
  %s3 = inlined_call_operand.hbm [shape: f32[256,256], index: 3, kind: input, shape index: {}]
  %s4 = inlined_call_operand.vmem [shape: f32[1,256], index: 4, kind: input, shape index: {}]
  %s5 = inlined_call_operand.vmem [shape: f32[1,256], index: 5, kind: input, shape index: {}]
  %s6 = inlined_call_operand.<no memory space> [shape: f32[1,1], index: 6, kind: input, shape index: {}]
  %s7 = inlined_call_operand.hbm [shape: f32[1,16], index: 7, kind: output, shape index: {}]
  %s8 = sld [smem:[#allocation0]]
  $region50: #{tpu_custom_call.1} parent=0
    _
  %s10 = ssub.s32 1, %s8
  %s11 = scalar_select 0, %s10, %s8
  %12 = sst [smem:[#allocation2]] %s6
  $region1: #{tpu_custom_call.1} parent=0
    #allocation3 [shape = 'u8[8192]{0}', space=vmem, size = 0x2000, scoped, tag = 'input window, operand 0, single buffered']
    #allocation4 [shape = 's32[1]{0}', space=sflag, size = 0x4, scoped, tag = 'scoped memory for tpu_custom_call.1']
    #allocation5 [shape = 's32[1]{0}', space=sflag, size = 0x4, scoped, tag = 'scoped memory for tpu_custom_call.1']
    #allocation6 [shape = 'u8[24576]{0}', space=vmem, size = 0x6000, scoped, tag = 'input window, operand 1, single buffered']
    #allocation7 [shape = 's32[1]{0}', space=sflag, size = 0x4, scoped, tag = 'scoped memory for tpu_custom_call.1']
    #allocation8 [shape = 'u8[262144]{0}', space=vmem, size = 0x40000, scoped, tag = 'input window, operand 3, single buffered']
    #allocation9 [shape = 'u8[512]{0}', space=vmem, size = 0x400, scoped, tag = 'output window, operand 0, single buffered']
    %13 = vsyncpa [#allocation4], 0
    %14 = vsyncpa [#allocation7], 0
    %15 = vsyncpa [#allocation5], 0
    // Predicated region
    $region2: #{tpu_custom_call.1} parent=1 // pred_check
      _
    $region3: #{tpu_custom_call.1} parent=1 // pred_check_branch
      %17 = sbr.rel (0) target = $region5
    $region4: #{tpu_custom_call.1} parent=1 // pred_region
      %s19 = ssub.s32 256, 256
      %20 = vsyncadd [#allocation4], %s19
      %s21 = sshll.u32 [#allocation3], 4
      %s22 = int_to_ptr.vmem [resolvable:$true] %s21
      %27 = dma.hbm_to_vmem [thread:$0]  %s0, 256, %s22, [#allocation4], 128, 128, 8
    $region5: #{tpu_custom_call.1} parent=1 // pred_fallthru
      _
    // Predicated region
    $region6: #{tpu_custom_call.1} parent=1 // pred_check
      _
    $region7: #{tpu_custom_call.1} parent=1 // pred_check_branch
      %29 = sbr.rel (0) target = $region9
    $region8: #{tpu_custom_call.1} parent=1 // pred_region
      %s31 = ssub.s32 768, 768
      %32 = vsyncadd [#allocation7], %s31
      %s33 = sshll.u32 [#allocation6], 4
      %s34 = int_to_ptr.vmem [resolvable:$true] %s33
      %39 = dma.hbm_to_vmem [thread:$0]  %s1, 768, %s34, [#allocation7], 256, 256, 16
    $region9: #{tpu_custom_call.1} parent=1 // pred_fallthru
      _
    // Predicated region
    $region10: #{tpu_custom_call.1} parent=1 // pred_check
      _
    $region11: #{tpu_custom_call.1} parent=1 // pred_check_branch
      %41 = sbr.rel (0) target = $region13
    $region12: #{tpu_custom_call.1} parent=1 // pred_region
      _
    $region13: #{tpu_custom_call.1} parent=1 // pred_fallthru
      _
    // Predicated region
    $region14: #{tpu_custom_call.1} parent=1 // pred_check
      _
    $region15: #{tpu_custom_call.1} parent=1 // pred_check_branch
      %43 = sbr.rel (0) target = $region17
    $region16: #{tpu_custom_call.1} parent=1 // pred_region
      %s45 = ssub.s32 8192, 8192
      %46 = vsyncadd [#allocation7], %s45
      %s47 = sshll.u32 [#allocation8], 4
      %s48 = int_to_ptr.vmem [resolvable:$true] %s47
      %53 = dma.hbm_to_vmem [thread:$0]  %s3, 8192, %s48, [#allocation7], 256, 256, 16
    $region17: #{tpu_custom_call.1} parent=1 // pred_fallthru
      _
    // Predicated region
    $region18: #{tpu_custom_call.1} parent=1 // pred_check
      _
    $region19: #{tpu_custom_call.1} parent=1 // pred_check_branch
      %55 = sbr.rel (0) target = $region21
    $region20: #{tpu_custom_call.1} parent=1 // pred_region
      _
    $region21: #{tpu_custom_call.1} parent=1 // pred_fallthru
      _
    // Predicated region
    $region22: #{tpu_custom_call.1} parent=1 // pred_check
      _
    $region23: #{tpu_custom_call.1} parent=1 // pred_check_branch
      %57 = sbr.rel (0) target = $region25
    $region24: #{tpu_custom_call.1} parent=1 // pred_region
      _
    $region25: #{tpu_custom_call.1} parent=1 // pred_fallthru
      _
    // Predicated region
    $region26: #{tpu_custom_call.1} parent=1 // pred_check
      _
    $region27: #{tpu_custom_call.1} parent=1 // pred_check_branch
      %59 = sbr.rel (0) target = $region29
    $region28: #{tpu_custom_call.1} parent=1 // pred_region
      _
    $region29: #{tpu_custom_call.1} parent=1 // pred_fallthru
      _
    // Predicated region
    $region30: #{tpu_custom_call.1} parent=1 // pred_check
      _
    $region31: #{tpu_custom_call.1} parent=1 // pred_check_branch
      %61 = sbr.rel (0) target = $region33
    $region32: #{tpu_custom_call.1} parent=1 // pred_region
      %62 = dma.done [#allocation4], 256
    $region33: #{tpu_custom_call.1} parent=1 // pred_fallthru
      _
    // Predicated region
    $region34: #{tpu_custom_call.1} parent=1 // pred_check
      _
    $region35: #{tpu_custom_call.1} parent=1 // pred_check_branch
      %64 = sbr.rel (0) target = $region37
    $region36: #{tpu_custom_call.1} parent=1 // pred_region
      %65 = dma.done [#allocation7], 768
    $region37: #{tpu_custom_call.1} parent=1 // pred_fallthru
      _
    // Predicated region
    $region38: #{tpu_custom_call.1} parent=1 // pred_check
      _
    $region39: #{tpu_custom_call.1} parent=1 // pred_check_branch
      %67 = sbr.rel (0) target = $region41
    $region40: #{tpu_custom_call.1} parent=1 // pred_region
      %68 = dma.done [#allocation7], 8192
    $region41: #{tpu_custom_call.1} parent=1 // pred_fallthru
      _
    %v69 = vld [vmem:[#allocation3] sm:$0xff]
    %v70 = vld [vmem:[#allocation3 + $0x8] sm:$0xff]
    %v71 = vld [vmem:[#allocation6] sm:$0xff]
    %v72 = vld [vmem:[#allocation6 + $0x8] sm:$0xff]
    %v73 = vld [vmem:[#allocation6 + $0x10] sm:$0xff]
    %v74 = vld [vmem:[#allocation6 + $0x18] sm:$0xff]
    %v75 = vld [vmem:[#allocation6 + $0x20] sm:$0xff]
    %v76 = vld [vmem:[#allocation6 + $0x28] sm:$0xff]
    %v77 = vld [vmem:[%s2] sm:$0x3]
    %v79 = vlaneseq
    %v80 = vshrl.u32 %v79, 7
    %v81 = vsub.s32 0, %v80
    %v82 = vrot.slane %v77, %v81
    %v83 = vlaneseq
    %v84 = vshrl.u32 %v83, 7
    %v85 = vsub.s32 1, %v84
    %v86 = vrot.slane %v77, %v85
    %vm89 = vcmask 195584
    %v91 = vsel %vm89, %v69, 0
    %v94 = vsel %vm89, %v70, 0
    %96 = vmatprep.subr.mxu0 %v72
    %97 = vmatpush1.msra.mxu0 %v71
    %98 = vmatprep.subr.mxu0 %v74
    %99 = vmatpush1.msra.mxu0 %v73
    %100 = vmatprep.subr.mxu0 %v76
    %101 = vmatpush1.msra.mxu0 %v75
    %102 = vmatprep.subr.mxu0 0.0
    %103 = vmatpush1.msra.mxu0 0.0
    %104 = vmatprep.subr.mxu0 0.0
    %105 = vmatpush1.msra.mxu0 0.0
    %106 = vmatprep.subr.mxu0 0.0
    %107 = vmatpush1.msra.mxu0 0.0
    %108 = vmatprep.subr.mxu0 0.0
    %109 = vmatpush1.msra.mxu0 0.0
    %110 = vmatprep.subr.mxu0 0.0
    %111 = vmatpush1.msra.mxu0 0.0
    %112 = vmatprep.subr.mxu0 0.0
    %113 = vmatpush1.msra.mxu0 0.0
    %114 = vmatprep.subr.mxu0 0.0
    %115 = vmatpush1.msra.mxu0 0.0
    %116 = vmatprep.subr.mxu0 0.0
    %117 = vmatpush1.msra.mxu0 0.0
    %118 = vmatprep.subr.mxu0 0.0
    %119 = vmatpush1.msra.mxu0 0.0
    %120 = vmatprep.subr.mxu0 0.0
    %121 = vmatpush1.msra.mxu0 0.0
    %122 = vmatprep.subr.mxu0 0.0
    %123 = vmatpush1.msra.mxu0 0.0
    %124 = vmatprep.subr.mxu0 0.0
    %125 = vmatpush1.msra.mxu0 0.0
    %126 = vmatprep.subr.mxu0 0.0
    %127 = vmatpush1.msra.mxu0 0.0
    %128 = vmatprep.subr.mxu0 0.0
    %129 = vmatpush1.msra.mxu0 0.0
    %130 = vmatprep.subr.mxu0 0.0
    %131 = vmatpush1.msra.mxu0 0.0
    %132 = vmatprep.subr.mxu0 0.0
    %133 = vmatpush1.msra.mxu0 0.0
    %134 = vmatprep.subr.mxu0 0.0
    %135 = vmatpush1.msra.mxu0 0.0
    %136 = vmatprep.subr.mxu0 0.0
    %137 = vmatpush1.msra.mxu0 0.0
    %138 = vmatprep.subr.mxu0 0.0
    %139 = vmatpush1.msra.mxu0 0.0
    %140 = vmatprep.subr.mxu0 0.0
    %141 = vmatpush1.msra.mxu0 0.0
    %142 = vmatprep.subr.mxu0 0.0
    %143 = vmatpush1.msra.mxu0 0.0
    %144 = vmatprep.subr.mxu0 0.0
    %145 = vmatpush1.msra.mxu0 0.0
    %146 = vmatprep.subr.mxu0 0.0
    %147 = vmatpush1.msra.mxu0 0.0
    %148 = vmatprep.subr.mxu0 0.0
    %149 = vmatpush1.msra.mxu0 0.0
    %150 = vmatprep.subr.mxu0 0.0
    %151 = vmatpush1.msra.mxu0 0.0
    %152 = vmatprep.subr.mxu0 0.0
    %153 = vmatpush1.msra.mxu0 0.0
    %154 = vmatprep.subr.mxu0 0.0
    %155 = vmatpush1.msra.mxu0 0.0
    %156 = vmatprep.subr.mxu0 0.0
    %157 = vmatpush1.msra.mxu0 0.0
    %158 = vmatprep.subr.mxu0 0.0
    %159 = vmatpush1.msra.mxu0 0.0
    %160 = vmatprep.mubr.f32.mxu0 0.0
    %161 = vmatmul.mubr.f32.gmra.mrb[0].mxu0 %v91
    %v162 = vpop.f32.mrb[0].mxu0
    %v163 = vadd.f32 %v82, %v162
    %v164 = vpop.f32.mrb[0].mxu0
    %v165 = vadd.f32 %v86, %v164
    %166 = vmatprep.mubr.f32.mxu0 0.0
    %167 = vmatmul.mubr.f32.gmra.mrb[0].mxu0 %v94
    %v168 = vpop.f32.mrb[0].mxu0
    %v169 = vadd.f32 %v82, %v168
    %v170 = vpop.f32.mrb[0].mxu0
    %v171 = vadd.f32 %v86, %v170
    %172 = vdwg.mxu0
    %v173 = vmax.f32 %v163, 0.0
    %v174 = vmax.f32 %v165, 0.0
    %v175 = vmax.f32 %v169, 0.0
    %v176 = vmax.f32 %v171, 0.0
    %v177 = vld [vmem:[#allocation8] sm:$0xff]
    %v178 = vld [vmem:[#allocation8 + $0x8] sm:$0xff]
    %v179 = vld [vmem:[#allocation8 + $0x10] sm:$0xff]
    %v180 = vld [vmem:[#allocation8 + $0x18] sm:$0xff]
    %v181 = vld [vmem:[#allocation8 + $0x20] sm:$0xff]
    %v182 = vld [vmem:[#allocation8 + $0x28] sm:$0xff]
    %v183 = vld [vmem:[#allocation8 + $0x30] sm:$0xff]
    %v184 = vld [vmem:[#allocation8 + $0x38] sm:$0xff]
    %v185 = vld [vmem:[#allocation8 + $0x40] sm:$0xff]
    %v186 = vld [vmem:[#allocation8 + $0x48] sm:$0xff]
    %v187 = vld [vmem:[#allocation8 + $0x50] sm:$0xff]
    %v188 = vld [vmem:[#allocation8 + $0x58] sm:$0xff]
    %v189 = vld [vmem:[#allocation8 + $0x60] sm:$0xff]
    %v190 = vld [vmem:[#allocation8 + $0x68] sm:$0xff]
    %v191 = vld [vmem:[#allocation8 + $0x70] sm:$0xff]
    %v192 = vld [vmem:[#allocation8 + $0x78] sm:$0xff]
    %v193 = vld [vmem:[#allocation8 + $0x80] sm:$0xff]
    %v194 = vld [vmem:[#allocation8 + $0x88] sm:$0xff]
    %v195 = vld [vmem:[#allocation8 + $0x90] sm:$0xff]
    %v196 = vld [vmem:[#allocation8 + $0x98] sm:$0xff]
    %v197 = vld [vmem:[#allocation8 + $0xa0] sm:$0xff]
    %v198 = vld [vmem:[#allocation8 + $0xa8] sm:$0xff]
    %v199 = vld [vmem:[#allocation8 + $0xb0] sm:$0xff]
    %v200 = vld [vmem:[#allocation8 + $0xb8] sm:$0xff]
    %v201 = vld [vmem:[#allocation8 + $0xc0] sm:$0xff]
    %v202 = vld [vmem:[#allocation8 + $0xc8] sm:$0xff]
    %v203 = vld [vmem:[#allocation8 + $0xd0] sm:$0xff]
    %v204 = vld [vmem:[#allocation8 + $0xd8] sm:$0xff]
    %v205 = vld [vmem:[#allocation8 + $0xe0] sm:$0xff]
    %v206 = vld [vmem:[#allocation8 + $0xe8] sm:$0xff]
    %v207 = vld [vmem:[#allocation8 + $0xf0] sm:$0xff]
    %v208 = vld [vmem:[#allocation8 + $0xf8] sm:$0xff]
    %v209 = vld [vmem:[#allocation8 + $0x100] sm:$0xff]
    %v210 = vld [vmem:[#allocation8 + $0x108] sm:$0xff]
    %v211 = vld [vmem:[#allocation8 + $0x110] sm:$0xff]
    %v212 = vld [vmem:[#allocation8 + $0x118] sm:$0xff]
    %v213 = vld [vmem:[#allocation8 + $0x120] sm:$0xff]
    %v214 = vld [vmem:[#allocation8 + $0x128] sm:$0xff]
    %v215 = vld [vmem:[#allocation8 + $0x130] sm:$0xff]
    %v216 = vld [vmem:[#allocation8 + $0x138] sm:$0xff]
    %v217 = vld [vmem:[#allocation8 + $0x140] sm:$0xff]
    %v218 = vld [vmem:[#allocation8 + $0x148] sm:$0xff]
    %v219 = vld [vmem:[#allocation8 + $0x150] sm:$0xff]
    %v220 = vld [vmem:[#allocation8 + $0x158] sm:$0xff]
    %v221 = vld [vmem:[#allocation8 + $0x160] sm:$0xff]
    %v222 = vld [vmem:[#allocation8 + $0x168] sm:$0xff]
    %v223 = vld [vmem:[#allocation8 + $0x170] sm:$0xff]
    %v224 = vld [vmem:[#allocation8 + $0x178] sm:$0xff]
    %v225 = vld [vmem:[#allocation8 + $0x180] sm:$0xff]
    %v226 = vld [vmem:[#allocation8 + $0x188] sm:$0xff]
    %v227 = vld [vmem:[#allocation8 + $0x190] sm:$0xff]
    %v228 = vld [vmem:[#allocation8 + $0x198] sm:$0xff]
    %v229 = vld [vmem:[#allocation8 + $0x1a0] sm:$0xff]
    %v230 = vld [vmem:[#allocation8 + $0x1a8] sm:$0xff]
    %v231 = vld [vmem:[#allocation8 + $0x1b0] sm:$0xff]
    %v232 = vld [vmem:[#allocation8 + $0x1b8] sm:$0xff]
    %v233 = vld [vmem:[#allocation8 + $0x1c0] sm:$0xff]
    %v234 = vld [vmem:[#allocation8 + $0x1c8] sm:$0xff]
    %v235 = vld [vmem:[#allocation8 + $0x1d0] sm:$0xff]
    %v236 = vld [vmem:[#allocation8 + $0x1d8] sm:$0xff]
    %v237 = vld [vmem:[#allocation8 + $0x1e0] sm:$0xff]
    %v238 = vld [vmem:[#allocation8 + $0x1e8] sm:$0xff]
    %v239 = vld [vmem:[#allocation8 + $0x1f0] sm:$0xff]
    %v240 = vld [vmem:[#allocation8 + $0x1f8] sm:$0xff]
    %v241 = vld [vmem:[%s4] sm:$0x3]
    %v243 = vlaneseq
    %v244 = vshrl.u32 %v243, 7
    %v245 = vsub.s32 0, %v244
    %v246 = vrot.slane %v241, %v245
    %v247 = vlaneseq
    %v248 = vshrl.u32 %v247, 7
    %v249 = vsub.s32 1, %v248
    %v250 = vrot.slane %v241, %v249
    %253 = vmatprep.subr.mxu0 %v178
    %254 = vmatpush1.msra.mxu0 %v177
    %255 = vmatprep.subr.mxu0 %v180
    %256 = vmatpush1.msra.mxu0 %v179
    %257 = vmatprep.subr.mxu0 %v182
    %258 = vmatpush1.msra.mxu0 %v181
    %259 = vmatprep.subr.mxu0 %v184
    %260 = vmatpush1.msra.mxu0 %v183
    %261 = vmatprep.subr.mxu0 %v186
    %262 = vmatpush1.msra.mxu0 %v185
    %263 = vmatprep.subr.mxu0 %v188
    %264 = vmatpush1.msra.mxu0 %v187
    %265 = vmatprep.subr.mxu0 %v190
    %266 = vmatpush1.msra.mxu0 %v189
    %267 = vmatprep.subr.mxu0 %v192
    %268 = vmatpush1.msra.mxu0 %v191
    %269 = vmatprep.subr.mxu0 %v194
    %270 = vmatpush1.msra.mxu0 %v193
    %271 = vmatprep.subr.mxu0 %v196
    %272 = vmatpush1.msra.mxu0 %v195
    %273 = vmatprep.subr.mxu0 %v198
    %274 = vmatpush1.msra.mxu0 %v197
    %275 = vmatprep.subr.mxu0 %v200
    %276 = vmatpush1.msra.mxu0 %v199
    %277 = vmatprep.subr.mxu0 %v202
    %278 = vmatpush1.msra.mxu0 %v201
    %279 = vmatprep.subr.mxu0 %v204
    %280 = vmatpush1.msra.mxu0 %v203
    %281 = vmatprep.subr.mxu0 %v206
    %282 = vmatpush1.msra.mxu0 %v205
    %283 = vmatprep.subr.mxu0 %v208
    %284 = vmatpush1.msra.mxu0 %v207
    %285 = vmatprep.subr.mxu0 %v210
    %286 = vmatpush1.msra.mxu0 %v209
    %287 = vmatprep.subr.mxu0 %v212
    %288 = vmatpush1.msra.mxu0 %v211
    %289 = vmatprep.subr.mxu0 %v214
    %290 = vmatpush1.msra.mxu0 %v213
    %291 = vmatprep.subr.mxu0 %v216
    %292 = vmatpush1.msra.mxu0 %v215
    %293 = vmatprep.subr.mxu0 %v218
    %294 = vmatpush1.msra.mxu0 %v217
    %295 = vmatprep.subr.mxu0 %v220
    %296 = vmatpush1.msra.mxu0 %v219
    %297 = vmatprep.subr.mxu0 %v222
    %298 = vmatpush1.msra.mxu0 %v221
    %299 = vmatprep.subr.mxu0 %v224
    %300 = vmatpush1.msra.mxu0 %v223
    %301 = vmatprep.subr.mxu0 %v226
    %302 = vmatpush1.msra.mxu0 %v225
    %303 = vmatprep.subr.mxu0 %v228
    %304 = vmatpush1.msra.mxu0 %v227
    %305 = vmatprep.subr.mxu0 %v230
    %306 = vmatpush1.msra.mxu0 %v229
    %307 = vmatprep.subr.mxu0 %v232
    %308 = vmatpush1.msra.mxu0 %v231
    %309 = vmatprep.subr.mxu0 %v234
    %310 = vmatpush1.msra.mxu0 %v233
    %311 = vmatprep.subr.mxu0 %v236
    %312 = vmatpush1.msra.mxu0 %v235
    %313 = vmatprep.subr.mxu0 %v238
    %314 = vmatpush1.msra.mxu0 %v237
    %315 = vmatprep.subr.mxu0 %v240
    %316 = vmatpush1.msra.mxu0 %v239
    %317 = vmatprep.mubr.f32.mxu0 %v174
    %318 = vmatmul.mubr.f32.gmra.mrb[0].mxu0 %v173
    %v319 = vpop.f32.mrb[0].mxu0
    %v320 = vadd.f32 %v246, %v319
    %v321 = vpop.f32.mrb[0].mxu0
    %v322 = vadd.f32 %v250, %v321
    %323 = vmatprep.mubr.f32.mxu0 %v176
    %324 = vmatmul.mubr.f32.gmra.mrb[0].mxu0 %v175
    %v325 = vpop.f32.mrb[0].mxu0
    %v326 = vadd.f32 %v246, %v325
    %v327 = vpop.f32.mrb[0].mxu0
    %v328 = vadd.f32 %v250, %v327
    %329 = vdwg.mxu0
    %v330 = vmax.f32 %v320, 0.0
    %v331 = vmax.f32 %v322, 0.0
    %v332 = vmax.f32 %v326, 0.0
    %v333 = vmax.f32 %v328, 0.0
    %v334 = vld [vmem:[%s5] sm:$0x3]
    %s335 = sld [smem:[#allocation2]]
    %v336 = vstv %s335
    %v338 = vlaneseq
    %v339 = vshrl.u32 %v338, 7
    %v340 = vsub.s32 0, %v339
    %v341 = vrot.slane %v334, %v340
    %v342 = vlaneseq
    %v343 = vshrl.u32 %v342, 7
    %v344 = vsub.s32 1, %v343
    %v345 = vrot.slane %v334, %v344
    %348 = vmatprep.subr.mxu0 %v331
    %349 = vmatpush1.xpose.msra.mxu0 %v330
    %350 = vmatprep.subr.mxu0 %v333
    %351 = vmatpush1.xpose.msra.mxu0 %v332
    %352 = vmatprep.subr.mxu0 0.0
    %353 = vmatpush1.xpose.msra.mxu0 0.0
    %354 = vmatprep.subr.mxu0 0.0
    %355 = vmatpush1.xpose.msra.mxu0 0.0
    %356 = vmatprep.subr.mxu0 0.0
    %357 = vmatpush1.xpose.msra.mxu0 0.0
    %358 = vmatprep.subr.mxu0 0.0
    %359 = vmatpush1.xpose.msra.mxu0 0.0
    %360 = vmatprep.subr.mxu0 0.0
    %361 = vmatpush1.xpose.msra.mxu0 0.0
    %362 = vmatprep.subr.mxu0 0.0
    %363 = vmatpush1.xpose.msra.mxu0 0.0
    %364 = vmatprep.subr.mxu0 0.0
    %365 = vmatpush1.xpose.msra.mxu0 0.0
    %366 = vmatprep.subr.mxu0 0.0
    %367 = vmatpush1.xpose.msra.mxu0 0.0
    %368 = vmatprep.subr.mxu0 0.0
    %369 = vmatpush1.xpose.msra.mxu0 0.0
    %370 = vmatprep.subr.mxu0 0.0
    %371 = vmatpush1.xpose.msra.mxu0 0.0
    %372 = vmatprep.subr.mxu0 0.0
    %373 = vmatpush1.xpose.msra.mxu0 0.0
    %374 = vmatprep.subr.mxu0 0.0
    %375 = vmatpush1.xpose.msra.mxu0 0.0
    %376 = vmatprep.subr.mxu0 0.0
    %377 = vmatpush1.xpose.msra.mxu0 0.0
    %378 = vmatprep.subr.mxu0 0.0
    %379 = vmatpush1.xpose.msra.mxu0 0.0
    %380 = vmatprep.subr.mxu0 0.0
    %381 = vmatpush1.xpose.msra.mxu0 0.0
    %382 = vmatprep.subr.mxu0 0.0
    %383 = vmatpush1.xpose.msra.mxu0 0.0
    %384 = vmatprep.subr.mxu0 0.0
    %385 = vmatpush1.xpose.msra.mxu0 0.0
    %386 = vmatprep.subr.mxu0 0.0
    %387 = vmatpush1.xpose.msra.mxu0 0.0
    %388 = vmatprep.subr.mxu0 0.0
    %389 = vmatpush1.xpose.msra.mxu0 0.0
    %390 = vmatprep.subr.mxu0 0.0
    %391 = vmatpush1.xpose.msra.mxu0 0.0
    %392 = vmatprep.subr.mxu0 0.0
    %393 = vmatpush1.xpose.msra.mxu0 0.0
    %394 = vmatprep.subr.mxu0 0.0
    %395 = vmatpush1.xpose.msra.mxu0 0.0
    %396 = vmatprep.subr.mxu0 0.0
    %397 = vmatpush1.xpose.msra.mxu0 0.0
    %398 = vmatprep.subr.mxu0 0.0
    %399 = vmatpush1.xpose.msra.mxu0 0.0
    %400 = vmatprep.subr.mxu0 0.0
    %401 = vmatpush1.xpose.msra.mxu0 0.0
    %402 = vmatprep.subr.mxu0 0.0
    %403 = vmatpush1.xpose.msra.mxu0 0.0
    %404 = vmatprep.subr.mxu0 0.0
    %405 = vmatpush1.xpose.msra.mxu0 0.0
    %406 = vmatprep.subr.mxu0 0.0
    %407 = vmatpush1.xpose.msra.mxu0 0.0
    %408 = vmatprep.subr.mxu0 0.0
    %409 = vmatpush1.xpose.msra.mxu0 0.0
    %410 = vmatprep.subr.mxu0 0.0
    %411 = vmatpush1.xpose.msra.mxu0 0.0
    %412 = vmatprep.mubr.f32.mxu0 %v345
    %413 = vmatmul.mubr.f32.gmra.mrb[0].mxu0 %v341
    %v414 = vpop.f32.mrb[0].mxu0
    %v415 = vadd.f32 %v336, %v414
    %v416 = vpop.f32.mrb[0].mxu0
    %417 = vdwg.mxu0
    %vm418 = vcmask 122880
    %419 = vst.msk [vmem:[#allocation9] sm:$0x1] %vm418, %v415
    // Predicated region
    $region42: #{tpu_custom_call.1} parent=1 // pred_check
      _
    $region43: #{tpu_custom_call.1} parent=1 // pred_check_branch
      %421 = sbr.rel (0) target = $region45
    $region44: #{tpu_custom_call.1} parent=1 // pred_region
      %s423 = ssub.s32 16, 16
      %424 = vsyncadd [#allocation5], %s423
      %s426 = sshll.u32 [#allocation9], 4
      %s427 = int_to_ptr.vmem [resolvable:$true] %s426
      %429 = dma.vmem_to_hbm [thread:$0]  %s427, 16, %s7, [#allocation5]
    $region45: #{tpu_custom_call.1} parent=1 // pred_fallthru
      _
    // Predicated region
    $region46: #{tpu_custom_call.1} parent=1 // pred_check
      _
    $region47: #{tpu_custom_call.1} parent=1 // pred_check_branch
      %431 = sbr.rel (0) target = $region49
    $region48: #{tpu_custom_call.1} parent=1 // pred_region
      %432 = dma.done [#allocation5], 16
    $region49: #{tpu_custom_call.1} parent=1 // pred_fallthru
      _
    %433 = vsyncpa [#allocation4], 1
    %434 = vsyncpa [#allocation7], 1
    %435 = vsyncpa [#allocation5], 1

</llo_original>
